<compile_context>
chip_gen: v7x
topology: tpu7x:2x2x1
jax: 0.10.0
libtpu: 0.0.40
codegen_flags: <defaults>
</compile_context>

<pallas_src>
import functools

import jax
import jax.numpy as jnp
from jax import lax
from jax.experimental import pallas as pl
from jax.experimental.pallas import tpu as pltpu


def vq_kernel(x_ref, emb_t2_ref, e_sq_ref,
              q_ref, enc_ref, sqerr_ref, encsum_ref,
              *, hw_total, ts, needs_mask):
    """One grid step processes a (C, TS) NCHW-native slab of one batch image."""
    s = pl.program_id(1)

    x_ct = x_ref[...]                       # (D, TS) f32, NCHW-native slab
    emb_t2 = emb_t2_ref[...]                # (D, K)  f32  == -2 * E^T
    e_sq = e_sq_ref[...]                    # (1, K)  f32  == ||E||^2

    TS = x_ct.shape[1]
    K = emb_t2.shape[1]

    # In-kernel relayout to rows (rides the XLU; replaces a wrapper HBM pass).
    x = x_ct.T                              # (TS, D)

    # Distance for the argmin: ||x||^2 is constant across K -> dropped; the -2
    # is pre-folded into emb_t2, so this is one matmul + one add.
    dist = e_sq + jnp.dot(x, emb_t2, preferred_element_type=jnp.float32)   # (TS, K)

    # argmin with first-occurrence semantics (torch.argmin) + dense one-hot.
    iota_k = lax.broadcasted_iota(jnp.int32, (TS, K), 1)
    min_d = jnp.min(dist, axis=1, keepdims=True)
    first_idx = jnp.min(jnp.where(dist == min_d, iota_k, K),
                        axis=1, keepdims=True)                             # (TS, 1)
    enc = (iota_k == first_idx).astype(jnp.float32)                        # (TS, K)

    # quantized slab directly in NCHW layout:
    #   q^T = E^T @ enc^T = -0.5 * (-2 E^T) contracted with enc over K.
    q_ct = -0.5 * lax.dot_general(emb_t2, enc, (((1,), (1,)), ((), ())),
                                  preferred_element_type=jnp.float32)      # (D, TS)

    q_ref[...] = q_ct                       # lane-dense (TS multiple of 128)
    enc_ref[...] = enc                      # lane-dense (K multiple of 128)

    # Per-tile statistics (partial outputs; reduced in the wrapper).
    diff = q_ct - x_ct                      # (D, TS)
    sq = diff * diff
    enc_stats = enc
    if needs_mask:
        # jnp.where (not multiply) so NaN/Inf garbage read from the ragged
        # out-of-bounds region cannot leak into the reductions.
        pos_col = s * ts + lax.broadcasted_iota(jnp.int32, (1, TS), 1)
        pos_row = s * ts + lax.broadcasted_iota(jnp.int32, (TS, 1), 0)
        sq = jnp.where(pos_col < hw_total, sq, 0.0)
        enc_stats = jnp.where(pos_row < hw_total, enc, 0.0)

    sqerr_ref[...] = jnp.sum(sq).reshape(1, 1)                             # (1, 1)
    encsum_ref[...] = jnp.sum(enc_stats, axis=0, keepdims=True)            # (1, K)


def vector_quantizer_ema_forward(x_nchw, embedding, commitment_cost, ts=1024):
    """Eval-mode forward of VectorQuantizerEMA.

    Returns (loss, quantized_nchw, perplexity, encodings), matching the PyTorch
    module's forward outputs when module.training is False.
    """
    N, C, H, W = x_nchw.shape
    D = C
    K, D_e = embedding.shape
    assert D_e == D
    HW = H * W
    M = N * HW

    # Free, layout-preserving view; no wrapper transpose / pad passes.
    x_flat = x_nchw.reshape(N, C, HW).astype(jnp.float32)       # (N, C, HW)

    # Spatial tile (lane dim of the x/q blocks): a multiple of 128 for lane-
    # dense DMA, never larger than the spatial extent; ragged tail handled by
    # Pallas store clipping + in-kernel masking of the statistics.
    if HW >= 128:
        ts = min(int(ts), (HW // 128) * 128)
        ts = max(128, (ts // 128) * 128)
    else:
        ts = HW                      # block spans the full (small) spatial dim
    n_s = pl.cdiv(HW, ts)
    needs_mask = (HW % ts) != 0

    # Hoisted codebook preprocessing (single resident operand + row norms).
    emb_f32 = embedding.astype(jnp.float32)                     # (K, D)
    emb_t2 = -2.0 * emb_f32.T                                   # (D, K)
    e_sq = jnp.sum(emb_f32 * emb_f32, axis=1)[None, :]          # (1, K)

    kernel = functools.partial(vq_kernel, hw_total=HW, ts=ts,
                               needs_mask=needs_mask)

    # VMEM use is tiny at these shapes; raise vmem_limit_bytes only if ts / K
    # are pushed much larger (v5e scoped default 16 MiB, v7x physical 64 MiB).
    q_flat, enc3d, sqerr_p, encsum_p = pl.pallas_call(
        kernel,
        out_shape=(
            jax.ShapeDtypeStruct((N, C, HW), jnp.float32),      # quantized, NCHW
            jax.ShapeDtypeStruct((N, HW, K), jnp.float32),      # dense one-hot
            jax.ShapeDtypeStruct((N, n_s, 1, 1), jnp.float32),  # per-tile sq err
            jax.ShapeDtypeStruct((N, n_s, 1, K), jnp.float32),  # per-tile enc sum
        ),
        grid_spec=pltpu.PrefetchScalarGridSpec(
            num_scalar_prefetch=0,
            grid=(N, n_s),
            in_specs=[
                pl.BlockSpec((None, C, ts), lambda n, s: (n, 0, s)),   # x slab
                pl.BlockSpec((D, K), lambda n, s: (0, 0)),             # -2 E^T
                pl.BlockSpec((1, K), lambda n, s: (0, 0)),             # ||E||^2
            ],
            out_specs=[
                pl.BlockSpec((None, C, ts), lambda n, s: (n, 0, s)),
                pl.BlockSpec((None, ts, K), lambda n, s: (n, s, 0)),
                pl.BlockSpec((None, None, 1, 1), lambda n, s: (n, s, 0, 0)),
                pl.BlockSpec((None, None, 1, K), lambda n, s: (n, s, 0, 0)),
            ],
        ),
        # Per-tile partial outputs (no cross-step accumulators) -> both axes
        # are safe to shard across TensorCores (v7x megacore).
        compiler_params=pltpu.CompilerParams(
            dimension_semantics=("parallel", "parallel")),
    )(x_flat, emb_t2, e_sq)

    # Tiny final reductions over the per-tile partials.
    sqerr = jnp.sum(sqerr_p)
    encsum = jnp.sum(encsum_p, axis=(0, 1, 2))                  # (K,)

    e_latent_loss = sqerr / jnp.float32(M * D)
    loss = jnp.float32(commitment_cost) * e_latent_loss

    # Kernel already wrote the NCHW layout; reshape is free.
    # Eval-mode: the straight-through output `inputs + sg(quantized - inputs)`
    # is value-identical to `quantized`, so the extra elementwise pass is
    # skipped.  TODO(synk): reinstate the ST add if used under jax.grad.
    quantized_nchw = q_flat.reshape(N, C, H, W)

    encodings = enc3d.reshape(M, K)                             # NHWC row order

    avg_probs = encsum / jnp.float32(M)
    perplexity = jnp.exp(-jnp.sum(avg_probs * jnp.log(avg_probs + 1e-10)))

    return loss, quantized_nchw, perplexity, encodings


def _reference_forward(x_nchw, embedding, commitment_cost):
    """Pure-JAX reference mirroring the PyTorch eval forward."""
    inputs = jnp.transpose(x_nchw, (0, 2, 3, 1)).astype(jnp.float32)
    D = inputs.shape[-1]
    flat = inputs.reshape(-1, D)
    dist = (jnp.sum(flat ** 2, axis=1, keepdims=True)
            + jnp.sum(embedding ** 2, axis=1)
            - 2.0 * flat @ embedding.T)
    idx = jnp.argmin(dist, axis=1)
    enc = jax.nn.one_hot(idx, embedding.shape[0], dtype=jnp.float32)
    quantized = (enc @ embedding).reshape(inputs.shape)
    e_latent_loss = jnp.mean((quantized - inputs) ** 2)
    loss = commitment_cost * e_latent_loss
    q_st = inputs + lax.stop_gradient(quantized - inputs)
    avg_probs = jnp.mean(enc, axis=0)
    perplexity = jnp.exp(-jnp.sum(avg_probs * jnp.log(avg_probs + 1e-10)))
    return loss, jnp.transpose(q_st, (0, 3, 1, 2)), perplexity, enc


if __name__ == "__main__":
    # module config (small, deterministic)
    num_embeddings = 128
    embedding_dim = 32
    commitment_cost = 0.25

    key = jax.random.PRNGKey(0)
    k_x, k_emb, k_x2 = jax.random.split(key, 3)

    # embedding.weight ~ normal_()
    embedding = jax.random.normal(k_emb, (num_embeddings, embedding_dim),
                                  dtype=jnp.float32)

    # Primary run: NCHW input with C == embedding_dim, H = W = 16 -> HW = 256.
    # ts=128 (production default is 1024) so the (N, spatial) grid is (2, 2).
    x = jax.random.normal(k_x, (2, embedding_dim, 16, 16), dtype=jnp.float32)
    loss, quantized, perplexity, encodings = jax.block_until_ready(
        vector_quantizer_ema_forward(x, embedding, commitment_cost, ts=128))

    loss_r, quant_r, perp_r, enc_r = _reference_forward(
        x, embedding, commitment_cost)
    assert jnp.allclose(loss, loss_r, atol=1e-5, rtol=1e-5)
    assert jnp.allclose(quantized, quant_r, atol=1e-5, rtol=1e-5)
    assert jnp.allclose(perplexity, perp_r, atol=1e-4, rtol=1e-5)
    assert jnp.allclose(encodings, enc_r)

    # Ragged-tile run: H = W = 12 -> HW = 144, ts = 128 -> the last spatial
    # tile is ragged and exercises the store-clipping + stats-masking path.
    x2 = jax.random.normal(k_x2, (2, embedding_dim, 12, 12), dtype=jnp.float32)
    loss2, quant2, perp2, enc2 = jax.block_until_ready(
        vector_quantizer_ema_forward(x2, embedding, commitment_cost, ts=128))

    loss2_r, quant2_r, perp2_r, enc2_r = _reference_forward(
        x2, embedding, commitment_cost)
    assert jnp.allclose(loss2, loss2_r, atol=1e-5, rtol=1e-5)
    assert jnp.allclose(quant2, quant2_r, atol=1e-5, rtol=1e-5)
    assert jnp.allclose(perp2, perp2_r, atol=1e-4, rtol=1e-5)
    assert jnp.allclose(enc2, enc2_r)

    print("KERNEL_OK")
</pallas_src>

<mosaic_0001>
module attributes {stable_mosaic.version = 11 : i64} {
  func.func @vq_kernel(%arg0: i32, %arg1: i32, %arg2: memref<1x32x128xf32, #tpu.memory_space<vmem>>, %arg3: memref<32x128xf32, #tpu.memory_space<vmem>>, %arg4: memref<1x128xf32, #tpu.memory_space<vmem>>, %arg5: memref<1x32x128xf32, #tpu.memory_space<vmem>>, %arg6: memref<1x128x128xf32, #tpu.memory_space<vmem>>, %arg7: memref<1x1x1x1xf32, #tpu.memory_space<vmem>>, %arg8: memref<1x1x1x128xf32, #tpu.memory_space<vmem>>) attributes {dimension_semantics = [#tpu.dimension_semantics<parallel>, #tpu.dimension_semantics<parallel>], iteration_bounds = array<i64: 2, 2>, scalar_prefetch = 0 : i64, scratch_operands = 0 : i64, tpu.core_type = #tpu.core_type<tc>, window_params = [{transform_indices = @transform_0, window_bounds = array<i64: 1, 32, 128>}, {pipeline_mode = #tpu.pipeline_mode<synchronous>, transform_indices = @transform_1, window_bounds = array<i64: 32, 128>}, {pipeline_mode = #tpu.pipeline_mode<synchronous>, transform_indices = @transform_2, window_bounds = array<i64: 1, 128>}, {transform_indices = @transform_3, window_bounds = array<i64: 1, 32, 128>}, {transform_indices = @transform_4, window_bounds = array<i64: 1, 128, 128>}, {transform_indices = @transform_5, window_bounds = array<i64: 1, 1, 1, 1>}, {transform_indices = @transform_6, window_bounds = array<i64: 1, 1, 1, 128>}]} {
    %c0 = arith.constant 0 : index
    %c0_0 = arith.constant 0 : index
    %c0_1 = arith.constant 0 : index
    %0 = vector.load %arg2[%c0, %c0_0, %c0_1] : memref<1x32x128xf32, #tpu.memory_space<vmem>>, vector<1x32x128xf32>
    %1 = vector.shape_cast %0 : vector<1x32x128xf32> to vector<32x128xf32>
    %c0_2 = arith.constant 0 : index
    %c0_3 = arith.constant 0 : index
    %2 = vector.load %arg3[%c0_2, %c0_3] : memref<32x128xf32, #tpu.memory_space<vmem>>, vector<32x128xf32>
    %c0_4 = arith.constant 0 : index
    %c0_5 = arith.constant 0 : index
    %3 = vector.load %arg4[%c0_4, %c0_5] : memref<1x128xf32, #tpu.memory_space<vmem>>, vector<1x128xf32>
    %4 = tpu.transpose %1, [1, 0] : vector<32x128xf32> -> vector<128x32xf32>
    %cst = arith.constant dense<0.000000e+00> : vector<128x128xf32>
    %5 = tpu.matmul %4, %2, %cst {dimension_numbers = #tpu.dot_dimension_numbers<[1], [0], [0], [1], [0, 0, 1, 1], [], []>} : vector<128x32xf32>, vector<32x128xf32>, vector<128x128xf32> -> vector<128x128xf32>
    %6 = vector.broadcast %3 : vector<1x128xf32> to vector<128x128xf32>
    %7 = arith.addf %6, %5 : vector<128x128xf32>
    %8 = tpu.iota {dimensions = array<i32: 1>} : vector<128x128xi32>
    %cst_6 = arith.constant dense<0x7F800000> : vector<128xf32>
    %9 = vector.multi_reduction <minimumf>, %7, %cst_6 [1] : vector<128x128xf32> to vector<128xf32>
    %10 = vector.shape_cast %9 : vector<128xf32> to vector<128x1xf32>
    %11 = vector.broadcast %10 : vector<128x1xf32> to vector<128x128xf32>
    %12 = arith.cmpf oeq, %7, %11 : vector<128x128xf32>
    %c128_i32 = arith.constant 128 : i32
    %13 = vector.broadcast %c128_i32 : i32 to vector<128x128xi32>
    %14 = arith.select %12, %8, %13 : vector<128x128xi1>, vector<128x128xi32>
    %cst_7 = arith.constant dense<2147483647> : vector<128xi32>
    %15 = vector.multi_reduction <minsi>, %14, %cst_7 [1] : vector<128x128xi32> to vector<128xi32>
    %16 = vector.shape_cast %15 : vector<128xi32> to vector<128x1xi32>
    %17 = vector.broadcast %16 : vector<128x1xi32> to vector<128x128xi32>
    %18 = arith.cmpi eq, %8, %17 : vector<128x128xi32>
    %19 = arith.extui %18 : vector<128x128xi1> to vector<128x128xi32>
    %20 = arith.sitofp %19 : vector<128x128xi32> to vector<128x128xf32>
    %cst_8 = arith.constant dense<0.000000e+00> : vector<32x128xf32>
    %21 = tpu.matmul %2, %20, %cst_8 {dimension_numbers = #tpu.dot_dimension_numbers<[1], [1], [0], [0], [0, 0, 1, 0], [], []>} : vector<32x128xf32>, vector<128x128xf32>, vector<32x128xf32> -> vector<32x128xf32>
    %cst_9 = arith.constant -5.000000e-01 : f32
    %22 = vector.broadcast %cst_9 : f32 to vector<32x128xf32>
    %23 = arith.mulf %22, %21 : vector<32x128xf32>
    %c0_10 = arith.constant 0 : index
    %c0_11 = arith.constant 0 : index
    %c0_12 = arith.constant 0 : index
    %24 = vector.load %arg5[%c0_10, %c0_11, %c0_12] : memref<1x32x128xf32, #tpu.memory_space<vmem>>, vector<1x32x128xf32>
    %25 = vector.shape_cast %24 : vector<1x32x128xf32> to vector<32x128xf32>
    %26 = vector.shape_cast %23 : vector<32x128xf32> to vector<1x32x128xf32>
    tpu.vector_store %arg5[%c0_10, %c0_11, %c0_12], %26 {strides = array<i32>} : memref<1x32x128xf32, #tpu.memory_space<vmem>>, vector<1x32x128xf32>,
    %c0_13 = arith.constant 0 : index
    %c0_14 = arith.constant 0 : index
    %c0_15 = arith.constant 0 : index
    %27 = vector.load %arg6[%c0_13, %c0_14, %c0_15] : memref<1x128x128xf32, #tpu.memory_space<vmem>>, vector<1x128x128xf32>
    %28 = vector.shape_cast %27 : vector<1x128x128xf32> to vector<128x128xf32>
    %29 = vector.shape_cast %20 : vector<128x128xf32> to vector<1x128x128xf32>
    tpu.vector_store %arg6[%c0_13, %c0_14, %c0_15], %29 {strides = array<i32>} : memref<1x128x128xf32, #tpu.memory_space<vmem>>, vector<1x128x128xf32>,
    %30 = arith.subf %23, %1 : vector<32x128xf32>
    %31 = arith.mulf %30, %30 : vector<32x128xf32>
    %32 = vector.shape_cast %31 : vector<32x128xf32> to vector<1x32x128xf32>
    %cst_16 = arith.constant dense<0.000000e+00> : vector<1xf32>
    %33 = vector.multi_reduction <add>, %32, %cst_16 [1, 2] : vector<1x32x128xf32> to vector<1xf32>
    %34 = vector.shape_cast %33 : vector<1xf32> to vector<1x1x1xf32>
    %35 = vector.extract %34[0, 0, 0] : f32 from vector<1x1x1xf32>
    %36 = vector.broadcast %35 : f32 to vector<1x1xf32>
    %c0_17 = arith.constant 0 : index
    %c0_18 = arith.constant 0 : index
    %c0_19 = arith.constant 0 : index
    %c0_20 = arith.constant 0 : index
    %37 = vector.load %arg7[%c0_17, %c0_18, %c0_19, %c0_20] : memref<1x1x1x1xf32, #tpu.memory_space<vmem>>, vector<1x1x1x1xf32>
    %38 = vector.shape_cast %37 : vector<1x1x1x1xf32> to vector<1x1xf32>
    %39 = vector.shape_cast %36 : vector<1x1xf32> to vector<1x1x1x1xf32>
    tpu.vector_store %arg7[%c0_17, %c0_18, %c0_19, %c0_20], %39 {strides = array<i32>} : memref<1x1x1x1xf32, #tpu.memory_space<vmem>>, vector<1x1x1x1xf32>,
    %cst_21 = arith.constant dense<0.000000e+00> : vector<128xf32>
    %40 = vector.multi_reduction <add>, %20, %cst_21 [0] : vector<128x128xf32> to vector<128xf32>
    %41 = vector.shape_cast %40 : vector<128xf32> to vector<1x128xf32>
    %c0_22 = arith.constant 0 : index
    %c0_23 = arith.constant 0 : index
    %c0_24 = arith.constant 0 : index
    %c0_25 = arith.constant 0 : index
    %42 = vector.load %arg8[%c0_22, %c0_23, %c0_24, %c0_25] : memref<1x1x1x128xf32, #tpu.memory_space<vmem>>, vector<1x1x1x128xf32>
    %43 = vector.shape_cast %42 : vector<1x1x1x128xf32> to vector<1x128xf32>
    %44 = vector.shape_cast %41 : vector<1x128xf32> to vector<1x1x1x128xf32>
    tpu.vector_store %arg8[%c0_22, %c0_23, %c0_24, %c0_25], %44 {strides = array<i32>} : memref<1x1x1x128xf32, #tpu.memory_space<vmem>>, vector<1x1x1x128xf32>,
    return
  }
  func.func @transform_0(%arg0: i32, %arg1: i32) -> (i32, i32, i32) {
    %c0_i32 = arith.constant 0 : i32
    %c0_i32_0 = arith.constant 0 : i32
    return %arg0, %c0_i32, %arg1 : i32, i32, i32
  }
  func.func @transform_1(%arg0: i32, %arg1: i32) -> (i32, i32) {
    %c0_i32 = arith.constant 0 : i32
    %c0_i32_0 = arith.constant 0 : i32
    %c0_i32_1 = arith.constant 0 : i32
    return %c0_i32, %c0_i32_0 : i32, i32
  }
  func.func @transform_2(%arg0: i32, %arg1: i32) -> (i32, i32) {
    %c0_i32 = arith.constant 0 : i32
    %c0_i32_0 = arith.constant 0 : i32
    %c0_i32_1 = arith.constant 0 : i32
    return %c0_i32, %c0_i32_0 : i32, i32
  }
  func.func @transform_3(%arg0: i32, %arg1: i32) -> (i32, i32, i32) {
    %c0_i32 = arith.constant 0 : i32
    %c0_i32_0 = arith.constant 0 : i32
    return %arg0, %c0_i32, %arg1 : i32, i32, i32
  }
  func.func @transform_4(%arg0: i32, %arg1: i32) -> (i32, i32, i32) {
    %c0_i32 = arith.constant 0 : i32
    %c0_i32_0 = arith.constant 0 : i32
    return %arg0, %arg1, %c0_i32 : i32, i32, i32
  }
  func.func @transform_5(%arg0: i32, %arg1: i32) -> (i32, i32, i32, i32) {
    %c0_i32 = arith.constant 0 : i32
    %c0_i32_0 = arith.constant 0 : i32
    %c0_i32_1 = arith.constant 0 : i32
    return %arg0, %arg1, %c0_i32, %c0_i32_0 : i32, i32, i32, i32
  }
  func.func @transform_6(%arg0: i32, %arg1: i32) -> (i32, i32, i32, i32) {
    %c0_i32 = arith.constant 0 : i32
    %c0_i32_0 = arith.constant 0 : i32
    %c0_i32_1 = arith.constant 0 : i32
    return %arg0, %arg1, %c0_i32, %c0_i32_0 : i32, i32, i32, i32
  }
}

</mosaic_0001>

<llo_original>
// kernel: tpu_custom_call.1
$region0: #{tpu_custom_call.1}
  #allocation0 [shape = 'u32[]', space=smem, size = 0x4, offset = 0x4, fixed_abs, tag = 'smem constant byte address 0x4 - core index']
  #allocation1 [shape = 'u32[144,128]{1,0:T(1,128)}', space=vmem, size = 0x12000, scoped, tag = 'internal scratch']
  %s0 = inlined_call_operand.hbm [shape: f32[2,32,256], index: 0, kind: input, shape index: {}]
  %s1 = inlined_call_operand.hbm [shape: f32[32,128], index: 1, kind: input, shape index: {}]
  %s2 = inlined_call_operand.vmem [shape: f32[1,128], index: 2, kind: input, shape index: {}]
  %s3 = inlined_call_operand.hbm [shape: f32[2,32,256], index: 3, kind: output, shape index: {0}]
  %s4 = inlined_call_operand.hbm [shape: f32[2,256,128], index: 4, kind: output, shape index: {1}]
  %s5 = inlined_call_operand.vmem [shape: f32[2,2,1,1], index: 5, kind: output, shape index: {2}]
  %s6 = inlined_call_operand.hbm [shape: f32[2,2,1,128], index: 6, kind: output, shape index: {3}]
  %7 = xla_tuple %s3, %s4, %s5, %s6
  %s8 = sld [smem:[#allocation0]]
  $region77: #{tpu_custom_call.1} parent=0
    _
  %s10 = ssub.s32 1, %s8
  %s11 = scalar_select 0, %s10, %s8
  $region1: #{tpu_custom_call.1} parent=0
    #allocation2 [shape = 'u8[32768]{0}', space=vmem, size = 0x8000, scoped, tag = 'input window, operand 0']
    #allocation3 [shape = 's32[2]{0}', space=sflag, size = 0x8, scoped, tag = 'scoped memory for tpu_custom_call.1']
    #allocation4 [shape = 's32[2]{0}', space=sflag, size = 0x8, scoped, tag = 'scoped memory for tpu_custom_call.1']
    #allocation5 [shape = 'u8[16384]{0}', space=vmem, size = 0x4000, scoped, tag = 'input window, operand 1, single buffered']
    #allocation6 [shape = 's32[1]{0}', space=sflag, size = 0x4, scoped, tag = 'scoped memory for tpu_custom_call.1']
    #allocation7 [shape = 'u8[32768]{0}', space=vmem, size = 0x8000, scoped, tag = 'output window, operand 0']
    #allocation8 [shape = 'u8[131072]{0}', space=vmem, size = 0x20000, scoped, tag = 'output window, operand 1']
    #allocation9 [shape = 's32[2]{0}', space=sflag, size = 0x8, scoped, tag = 'scoped memory for tpu_custom_call.1']
    #allocation10 [shape = 'u8[1024]{0}', space=vmem, size = 0x400, scoped, tag = 'output window, operand 3']
    %12 = vsyncpa [#allocation3], 0
    %s13 = scalar_lea.sflag [#allocation3], 1
    %14 = vsyncpa %s13, 0
    %15 = vsyncpa [#allocation6], 0
    %16 = vsyncpa [#allocation4], 0
    %s17 = scalar_lea.sflag [#allocation4], 1
    %18 = vsyncpa %s17, 0
    %19 = vsyncpa [#allocation9], 0
    %s20 = scalar_lea.sflag [#allocation9], 1
    %21 = vsyncpa %s20, 0
    loop: start=0, step=1, limit=6
    $region2: #{tpu_custom_call.1} parent=1 // loop_pre_header
      _
    $region3: #{tpu_custom_call.1} parent=1 // loop_header
      %s23 = sphi 0, %s27
      %p24 = scmp.ge.s32.totalorder %s23, 6
      %s30 = sphi 0, %s42
      %s31 = sphi 0, %s38
      %s32 = sphi 0, %s30
      %s33 = sphi 0, %s31
      %s34 = sphi 0, %s32
      %s35 = sphi 0, %s33
      %s47 = sphi 0, %s49
      %s50 = sphi 0, %s47
      %s51 = sphi 0, %s50
      %s67 = sphi 0, %s51
      %s71 = sphi 0, %s71
      %s73 = sphi 0, %s71
      %s74 = sphi 0, %s73
      %s88 = sphi 0, %s74
      %s92 = sphi 0, %s92
      %s94 = sphi 0, %s92
      %s95 = sphi 0, %s94
      %s109 = sphi 0, %s95
      %s117 = sphi 0, %s119
      %s120 = sphi 0, %s117
      %s121 = sphi 0, %s120
      %s137 = sphi 0, %s121
      %s145 = sphi 0, %s147
      %s148 = sphi 0, %s145
      %s149 = sphi 0, %s148
      %s165 = sphi 0, %s149
      %s173 = sphi 0, %s175
      %s176 = sphi 0, %s173
      %s177 = sphi 0, %s176
      %s193 = sphi 0, %s177
      %s201 = sphi 0, %s203
      %s204 = sphi 0, %s201
      %s205 = sphi 0, %s204
      %s221 = sphi 0, %s205
    $region4: #{tpu_custom_call.1} parent=1 // loop_header_branch
      %26 = sbr.rel (%p24) target = $region8
    $region5: #{tpu_custom_call.1} parent=1 // loop_body
      %s28 = ssub.s32 %s23, 1
      %s29 = ssub.s32 %s23, 2
      %s36 = sadd.s32 1, %s31
      %p37 = scmp.ge.s32.totalorder %s36, 2
      %s38 = scalar_select %p37, 0, %s36
      %s39 = sadd.s32 1, %s30
      %s40 = scalar_select %p37, %s39, %s30
      %p41 = scmp.ge.s32.totalorder %s40, 2
      %s42 = scalar_select %p41, 0, %s40
      %s43 = ssub.s32 %s30, %s42
      %s44 = ssub.s32 %s31, %s38
      %s45 = sor.u32 %s43, %s44
      %p46 = scmp.eq.s32.totalorder %s45, 0
      %s48 = sadd.s32 %s47, 1
      %s49 = scalar_select %p46, %s47, %s48
      %p52 = pneg %p46
      %p53 = scmp.eq.s32.totalorder %s23, 3
      %p54 = por %p52, %p53
      %p55 = scmp.ne.s32.totalorder %s47, %s50
      %p56 = scmp.eq.s32.totalorder %s23, 0
      %p57 = por %p55, %p56
      %p58 = scmp.ne.s32.totalorder %s47, %s50
      %p59 = scmp.eq.s32.totalorder %s28, 3
      %p60 = por %p58, %p59
      %p61 = scmp.ne.s32.totalorder %s50, %s51
      %p62 = scmp.eq.s32.totalorder %s28, 0
      %p63 = por %p61, %p62
      %p64 = scmp.ne.s32.totalorder %s50, %s51
      %p65 = scmp.eq.s32.totalorder %s29, 3
      %p66 = por %p64, %p65
      %p68 = scmp.ne.s32.totalorder %s51, %s67
      %p69 = scmp.eq.s32.totalorder %s29, 0
      %p70 = por %p68, %p69
      %s72 = sadd.s32 %s71, 1
      %p75 = scmp.eq.s32.totalorder %s23, 3
      %p76 = scmp.ne.s32.totalorder %s71, %s73
      %p77 = scmp.eq.s32.totalorder %s23, 0
      %p78 = por %p76, %p77
      %p79 = scmp.ne.s32.totalorder %s71, %s73
      %p80 = scmp.eq.s32.totalorder %s28, 3
      %p81 = por %p79, %p80
      %p82 = scmp.ne.s32.totalorder %s73, %s74
      %p83 = scmp.eq.s32.totalorder %s28, 0
      %p84 = por %p82, %p83
      %p85 = scmp.ne.s32.totalorder %s73, %s74
      %p86 = scmp.eq.s32.totalorder %s29, 3
      %p87 = por %p85, %p86
      %p89 = scmp.ne.s32.totalorder %s74, %s88
      %p90 = scmp.eq.s32.totalorder %s29, 0
      %p91 = por %p89, %p90
      %s93 = sadd.s32 %s92, 1
      %p96 = scmp.eq.s32.totalorder %s23, 3
      %p97 = scmp.ne.s32.totalorder %s92, %s94
      %p98 = scmp.eq.s32.totalorder %s23, 0
      %p99 = por %p97, %p98
      %p100 = scmp.ne.s32.totalorder %s92, %s94
      %p101 = scmp.eq.s32.totalorder %s28, 3
      %p102 = por %p100, %p101
      %p103 = scmp.ne.s32.totalorder %s94, %s95
      %p104 = scmp.eq.s32.totalorder %s28, 0
      %p105 = por %p103, %p104
      %p106 = scmp.ne.s32.totalorder %s94, %s95
      %p107 = scmp.eq.s32.totalorder %s29, 3
      %p108 = por %p106, %p107
      %p110 = scmp.ne.s32.totalorder %s95, %s109
      %p111 = scmp.eq.s32.totalorder %s29, 0
      %p112 = por %p110, %p111
      %s113 = ssub.s32 %s30, %s42
      %s114 = ssub.s32 %s31, %s38
      %s115 = sor.u32 %s113, %s114
      %p116 = scmp.eq.s32.totalorder %s115, 0
      %s118 = sadd.s32 %s117, 1
      %s119 = scalar_select %p116, %s117, %s118
      %p122 = pneg %p116
      %p123 = scmp.eq.s32.totalorder %s23, 3
      %p124 = por %p122, %p123
      %p125 = scmp.ne.s32.totalorder %s117, %s120
      %p126 = scmp.eq.s32.totalorder %s23, 0
      %p127 = por %p125, %p126
      %p128 = scmp.ne.s32.totalorder %s117, %s120
      %p129 = scmp.eq.s32.totalorder %s28, 3
      %p130 = por %p128, %p129
      %p131 = scmp.ne.s32.totalorder %s120, %s121
      %p132 = scmp.eq.s32.totalorder %s28, 0
      %p133 = por %p131, %p132
      %p134 = scmp.ne.s32.totalorder %s120, %s121
      %p135 = scmp.eq.s32.totalorder %s29, 3
      %p136 = por %p134, %p135
      %p138 = scmp.ne.s32.totalorder %s121, %s137
      %p139 = scmp.eq.s32.totalorder %s29, 0
      %p140 = por %p138, %p139
      %s141 = ssub.s32 %s30, %s42
      %s142 = ssub.s32 %s31, %s38
      %s143 = sor.u32 %s141, %s142
      %p144 = scmp.eq.s32.totalorder %s143, 0
      %s146 = sadd.s32 %s145, 1
      %s147 = scalar_select %p144, %s145, %s146
      %p150 = pneg %p144
      %p151 = scmp.eq.s32.totalorder %s23, 3
      %p152 = por %p150, %p151
      %p153 = scmp.ne.s32.totalorder %s145, %s148
      %p154 = scmp.eq.s32.totalorder %s23, 0
      %p155 = por %p153, %p154
      %p156 = scmp.ne.s32.totalorder %s145, %s148
      %p157 = scmp.eq.s32.totalorder %s28, 3
      %p158 = por %p156, %p157
      %p159 = scmp.ne.s32.totalorder %s148, %s149
      %p160 = scmp.eq.s32.totalorder %s28, 0
      %p161 = por %p159, %p160
      %p162 = scmp.ne.s32.totalorder %s148, %s149
      %p163 = scmp.eq.s32.totalorder %s29, 3
      %p164 = por %p162, %p163
      %p166 = scmp.ne.s32.totalorder %s149, %s165
      %p167 = scmp.eq.s32.totalorder %s29, 0
      %p168 = por %p166, %p167
      %s169 = ssub.s32 %s30, %s42
      %s170 = ssub.s32 %s31, %s38
      %s171 = sor.u32 %s169, %s170
      %p172 = scmp.eq.s32.totalorder %s171, 0
      %s174 = sadd.s32 %s173, 1
      %s175 = scalar_select %p172, %s173, %s174
      %p178 = pneg %p172
      %p179 = scmp.eq.s32.totalorder %s23, 3
      %p180 = por %p178, %p179
      %p181 = scmp.ne.s32.totalorder %s173, %s176
      %p182 = scmp.eq.s32.totalorder %s23, 0
      %p183 = por %p181, %p182
      %p184 = scmp.ne.s32.totalorder %s173, %s176
      %p185 = scmp.eq.s32.totalorder %s28, 3
      %p186 = por %p184, %p185
      %p187 = scmp.ne.s32.totalorder %s176, %s177
      %p188 = scmp.eq.s32.totalorder %s28, 0
      %p189 = por %p187, %p188
      %p190 = scmp.ne.s32.totalorder %s176, %s177
      %p191 = scmp.eq.s32.totalorder %s29, 3
      %p192 = por %p190, %p191
      %p194 = scmp.ne.s32.totalorder %s177, %s193
      %p195 = scmp.eq.s32.totalorder %s29, 0
      %p196 = por %p194, %p195
      %s197 = ssub.s32 %s30, %s42
      %s198 = ssub.s32 %s31, %s38
      %s199 = sor.u32 %s197, %s198
      %p200 = scmp.eq.s32.totalorder %s199, 0
      %s202 = sadd.s32 %s201, 1
      %s203 = scalar_select %p200, %s201, %s202
      %p206 = pneg %p200
      %p207 = scmp.eq.s32.totalorder %s23, 3
      %p208 = por %p206, %p207
      %p209 = scmp.ne.s32.totalorder %s201, %s204
      %p210 = scmp.eq.s32.totalorder %s23, 0
      %p211 = por %p209, %p210
      %p212 = scmp.ne.s32.totalorder %s201, %s204
      %p213 = scmp.eq.s32.totalorder %s28, 3
      %p214 = por %p212, %p213
      %p215 = scmp.ne.s32.totalorder %s204, %s205
      %p216 = scmp.eq.s32.totalorder %s28, 0
      %p217 = por %p215, %p216
      %p218 = scmp.ne.s32.totalorder %s204, %s205
      %p219 = scmp.eq.s32.totalorder %s29, 3
      %p220 = por %p218, %p219
      %p222 = scmp.ne.s32.totalorder %s205, %s221
      %p223 = scmp.eq.s32.totalorder %s29, 0
      %p224 = por %p222, %p223
      %p225 = scmp.le.s32.totalorder 1, %s23
      %p226 = scmp.lt.s32.totalorder %s23, 5
      %p227 = pnand %p225, %p226
      %p228 = pneg %p227
      // Predicated region
      $region9: #{tpu_custom_call.1} parent=5 // pred_check
        _
      $region10: #{tpu_custom_call.1} parent=5 // pred_check_branch
        %230 = sbr.rel (%p227) target = $region12
      $region11: #{tpu_custom_call.1} parent=5 // pred_region
        %s231 = ssub.s32 %s23, 1
        // Predicated region
        $region13: #{tpu_custom_call.1} parent=11 // pred_check
          %p232 = pneg %p84
        $region14: #{tpu_custom_call.1} parent=11 // pred_check_branch
          %234 = sbr.rel (%p232) target = $region16
        $region15: #{tpu_custom_call.1} parent=11 // pred_region
          %s236 = ssub.s32 512, 512
          %237 = vsyncadd [#allocation6], %s236
          %s238 = sshll.u32 [#allocation5], 4
          %s239 = int_to_ptr.vmem [resolvable:$true] %s238
          %244 = dma.hbm_to_vmem [thread:$0]  %s1, 512, %s239, [#allocation6], 128, 128, 8
        $region16: #{tpu_custom_call.1} parent=11 // pred_fallthru
          _
        // Predicated region
        $region17: #{tpu_custom_call.1} parent=11 // pred_check
          %p245 = pneg %p105
        $region18: #{tpu_custom_call.1} parent=11 // pred_check_branch
          %247 = sbr.rel (%p245) target = $region20
        $region19: #{tpu_custom_call.1} parent=11 // pred_region
          _
        $region20: #{tpu_custom_call.1} parent=11 // pred_fallthru
          _
      $region12: #{tpu_custom_call.1} parent=5 // pred_fallthru
        _
      %p248 = scmp.lt.s32.totalorder %s23, 4
      // Predicated region
      $region21: #{tpu_custom_call.1} parent=5 // pred_check
        %p249 = pneg %p248
      $region22: #{tpu_custom_call.1} parent=5 // pred_check_branch
        %251 = sbr.rel (%p249) target = $region24
      $region23: #{tpu_custom_call.1} parent=5 // pred_region
        // Predicated region
        $region25: #{tpu_custom_call.1} parent=23 // pred_check
          %p252 = pneg %p57
        $region26: #{tpu_custom_call.1} parent=23 // pred_check_branch
          %254 = sbr.rel (%p252) target = $region28
        $region27: #{tpu_custom_call.1} parent=23 // pred_region
          %s255 = sand.u32 %s47, 1
          %s256 = scalar_lea.sflag [#allocation3], %s255
          %s257 = sand.u32 %s47, 1
          %s258 = smul.addr %s257, 32
          %s259 = scalar_lea.vmem [#allocation2], %s258
          %s261 = ssub.s32 512, 512
          %262 = vsyncadd %s256, %s261
          %s263 = smul.addr %s30, 8
          %s264 = sadd.s32 %s31, %s263
          %s265 = smul.addr %s264, 128
          %s266 = scalar_lea.hbm %s0, %s265
          %s267 = sshll.u32 %s259, 4
          %s268 = int_to_ptr.vmem [resolvable:$true] %s267
          %273 = dma.hbm_to_vmem [thread:$0]  %s266, 512, %s268, %s256, 256, 128, 8
        $region28: #{tpu_custom_call.1} parent=23 // pred_fallthru
          _
      $region24: #{tpu_custom_call.1} parent=5 // pred_fallthru
        _
      %p274 = scmp.le.s32.totalorder 1, %s23
      %p275 = scmp.lt.s32.totalorder %s23, 5
      %p276 = pnand %p274, %p275
      %p277 = pneg %p276
      // Predicated region
      $region29: #{tpu_custom_call.1} parent=5 // pred_check
        _
      $region30: #{tpu_custom_call.1} parent=5 // pred_check_branch
        %279 = sbr.rel (%p276) target = $region32
      $region31: #{tpu_custom_call.1} parent=5 // pred_region
        %s280 = ssub.s32 %s23, 1
        %s281 = sand.u32 %s50, 1
        %s282 = scalar_lea.sflag [#allocation3], %s281
        %s283 = sand.u32 %s50, 1
        %s284 = smul.addr %s283, 32
        %s285 = scalar_lea.vmem [#allocation2], %s284
        // Predicated region
        $region33: #{tpu_custom_call.1} parent=31 // pred_check
          %p286 = pneg %p63
        $region34: #{tpu_custom_call.1} parent=31 // pred_check_branch
          %288 = sbr.rel (%p286) target = $region36
        $region35: #{tpu_custom_call.1} parent=31 // pred_region
          %289 = dma.done %s282, 512
        $region36: #{tpu_custom_call.1} parent=31 // pred_fallthru
          _
        // Predicated region
        $region37: #{tpu_custom_call.1} parent=31 // pred_check
          %p290 = pneg %p84
        $region38: #{tpu_custom_call.1} parent=31 // pred_check_branch
          %292 = sbr.rel (%p290) target = $region40
        $region39: #{tpu_custom_call.1} parent=31 // pred_region
          %293 = dma.done [#allocation6], 512
        $region40: #{tpu_custom_call.1} parent=31 // pred_fallthru
          _
        %s294 = sand.u32 %s50, 1
        %s295 = scalar_lea.sflag [#allocation3], %s294
        %s296 = sand.u32 %s50, 1
        %s297 = smul.addr %s296, 32
        %s298 = scalar_lea.vmem [#allocation2], %s297
        %p299 = pneg %p63
        %p300 = pneg %p60
        %p301 = pneg %p84
        %p302 = pneg %p81
        %p303 = pneg %p105
        %p304 = pneg %p102
        %p305 = pneg %p133
        %p306 = pneg %p130
        %s307 = sand.u32 %s120, 1
        %s308 = scalar_lea.sflag [#allocation4], %s307
        %s309 = sand.u32 %s120, 1
        %s310 = smul.addr %s309, 32
        %s311 = scalar_lea.vmem [#allocation7], %s310
        %p312 = pneg %p161
        %p313 = pneg %p158
        %s314 = sand.u32 %s28, 1
        %s315 = scalar_lea.sflag [#allocation9], %s314
        %s316 = sand.u32 %s148, 1
        %s317 = smul.addr %s316, 128
        %s318 = scalar_lea.vmem [#allocation8], %s317
        %p319 = pneg %p189
        %p320 = pneg %p186
        %p321 = scmp.lt.s32.totalorder %s32, 1
        %s322 = scalar_select %p321, %s32, 1
        %p323 = scmp.lt.s32.totalorder %s33, 1
        %s324 = scalar_select %p323, %s33, 1
        %s325 = smul.addr %s322, 2
        %s326 = sadd.s32 %s324, %s325
        %s327 = scalar_lea.vmem %s5, %s326
        %p328 = pneg %p217
        %p329 = pneg %p214
        %s330 = sand.u32 %s28, 1
        %s331 = scalar_lea.sflag [#allocation9], %s330
        %s332 = sand.u32 %s204, 1
        %s333 = scalar_lea.vmem [#allocation10], %s332
        %s334 = smul.u32 16, %s33
        %p335 = scmp.lt.s32.totalorder %s32, 1
        %s336 = scalar_select %p335, %s32, 1
        %p337 = scmp.lt.s32.totalorder %s33, 1
        %s338 = scalar_select %p337, %s33, 1
        %s339 = smul.addr %s336, 2
        %s340 = sadd.s32 %s338, %s339
        %s341 = scalar_lea.vmem %s5, %s340
        %v342 = vld [vmem:[%s285] sm:$0xff]
        %v343 = vld [vmem:[%s285 + $0x8] sm:$0xff]
        %v344 = vld [vmem:[%s285 + $0x10] sm:$0xff]
        %v345 = vld [vmem:[%s285 + $0x18] sm:$0xff]
        %v346 = vld [vmem:[#allocation5] sm:$0xff]
        %v347 = vld [vmem:[#allocation5 + $0x8] sm:$0xff]
        %v348 = vld [vmem:[#allocation5 + $0x10] sm:$0xff]
        %v349 = vld [vmem:[#allocation5 + $0x18] sm:$0xff]
        %v350 = vld [vmem:[%s2] sm:$0x1]
        %351 = vxpose.xlu0.b32.start [1/16] %v342, 128
        %352 = vxpose.xlu0.b32.cont [2/16] %v343, 128
        %353 = vxpose.xlu0.b32.cont [3/16] %v344, 128
        %354 = vxpose.xlu0.b32.cont [4/16] %v345, 128
        %355 = vxpose.xlu0.b32.cont [5/16] 0.0, 128
        %356 = vxpose.xlu0.b32.cont [6/16] 0.0, 128
        %357 = vxpose.xlu0.b32.cont [7/16] 0.0, 128
        %358 = vxpose.xlu0.b32.cont [8/16] 0.0, 128
        %359 = vxpose.xlu0.b32.cont [9/16] 0.0, 128
        %360 = vxpose.xlu0.b32.cont [10/16] 0.0, 128
        %361 = vxpose.xlu0.b32.cont [11/16] 0.0, 128
        %362 = vxpose.xlu0.b32.cont [12/16] 0.0, 128
        %363 = vxpose.xlu0.b32.cont [13/16] 0.0, 128
        %364 = vxpose.xlu0.b32.cont [14/16] 0.0, 128
        %365 = vxpose.xlu0.b32.cont [15/16] 0.0, 128
        %366 = vxpose.xlu0.b32.end [16/16] 0.0, 128
        %v367 = vpop.trf.xlu0
        %v368 = vpop.trf.xlu0
        %v369 = vpop.trf.xlu0
        %v370 = vpop.trf.xlu0
        %v371 = vpop.trf.xlu0
        %v372 = vpop.trf.xlu0
        %v373 = vpop.trf.xlu0
        %v374 = vpop.trf.xlu0
        %v375 = vpop.trf.xlu0
        %v376 = vpop.trf.xlu0
        %v377 = vpop.trf.xlu0
        %v378 = vpop.trf.xlu0
        %v379 = vpop.trf.xlu0
        %v380 = vpop.trf.xlu0
        %v381 = vpop.trf.xlu0
        %v382 = vpop.trf.xlu0
        %vm383 = vcmask 261120
        %v385 = vsel %vm383, %v367, 0
        %v388 = vsel %vm383, %v368, 0
        %v391 = vsel %vm383, %v369, 0
        %v394 = vsel %vm383, %v370, 0
        %v397 = vsel %vm383, %v371, 0
        %v400 = vsel %vm383, %v372, 0
        %v403 = vsel %vm383, %v373, 0
        %v406 = vsel %vm383, %v374, 0
        %v409 = vsel %vm383, %v375, 0
        %v412 = vsel %vm383, %v376, 0
        %v415 = vsel %vm383, %v377, 0
        %v418 = vsel %vm383, %v378, 0
        %v421 = vsel %vm383, %v379, 0
        %v424 = vsel %vm383, %v380, 0
        %v427 = vsel %vm383, %v381, 0
        %v430 = vsel %vm383, %v382, 0
        %432 = vmatprep.subr.mxu0 0.0
        %433 = vmatpush1.msra.mxu0 %v346
        %434 = vmatprep.subr.mxu0 0.0
        %435 = vmatpush1.msra.mxu0 %v347
        %436 = vmatprep.subr.mxu0 0.0
        %437 = vmatpush1.msra.mxu0 %v348
        %438 = vmatprep.subr.mxu0 0.0
        %439 = vmatpush1.msra.mxu0 %v349
        %440 = vmatprep.subr.mxu0 0.0
        %441 = vmatpush1.msra.mxu0 0.0
        %442 = vmatprep.subr.mxu0 0.0
        %443 = vmatpush1.msra.mxu0 0.0
        %444 = vmatprep.subr.mxu0 0.0
        %445 = vmatpush1.msra.mxu0 0.0
        %446 = vmatprep.subr.mxu0 0.0
        %447 = vmatpush1.msra.mxu0 0.0
        %448 = vmatprep.subr.mxu0 0.0
        %449 = vmatpush1.msra.mxu0 0.0
        %450 = vmatprep.subr.mxu0 0.0
        %451 = vmatpush1.msra.mxu0 0.0
        %452 = vmatprep.subr.mxu0 0.0
        %453 = vmatpush1.msra.mxu0 0.0
        %454 = vmatprep.subr.mxu0 0.0
        %455 = vmatpush1.msra.mxu0 0.0
        %456 = vmatprep.subr.mxu0 0.0
        %457 = vmatpush1.msra.mxu0 0.0
        %458 = vmatprep.subr.mxu0 0.0
        %459 = vmatpush1.msra.mxu0 0.0
        %460 = vmatprep.subr.mxu0 0.0
        %461 = vmatpush1.msra.mxu0 0.0
        %462 = vmatprep.subr.mxu0 0.0
        %463 = vmatpush1.msra.mxu0 0.0
        %464 = vmatprep.subr.mxu0 0.0
        %465 = vmatpush1.msra.mxu0 0.0
        %466 = vmatprep.subr.mxu0 0.0
        %467 = vmatpush1.msra.mxu0 0.0
        %468 = vmatprep.subr.mxu0 0.0
        %469 = vmatpush1.msra.mxu0 0.0
        %470 = vmatprep.subr.mxu0 0.0
        %471 = vmatpush1.msra.mxu0 0.0
        %472 = vmatprep.subr.mxu0 0.0
        %473 = vmatpush1.msra.mxu0 0.0
        %474 = vmatprep.subr.mxu0 0.0
        %475 = vmatpush1.msra.mxu0 0.0
        %476 = vmatprep.subr.mxu0 0.0
        %477 = vmatpush1.msra.mxu0 0.0
        %478 = vmatprep.subr.mxu0 0.0
        %479 = vmatpush1.msra.mxu0 0.0
        %480 = vmatprep.subr.mxu0 0.0
        %481 = vmatpush1.msra.mxu0 0.0
        %482 = vmatprep.subr.mxu0 0.0
        %483 = vmatpush1.msra.mxu0 0.0
        %484 = vmatprep.subr.mxu0 0.0
        %485 = vmatpush1.msra.mxu0 0.0
        %486 = vmatprep.subr.mxu0 0.0
        %487 = vmatpush1.msra.mxu0 0.0
        %488 = vmatprep.subr.mxu0 0.0
        %489 = vmatpush1.msra.mxu0 0.0
        %490 = vmatprep.subr.mxu0 0.0
        %491 = vmatpush1.msra.mxu0 0.0
        %492 = vmatprep.subr.mxu0 0.0
        %493 = vmatpush1.msra.mxu0 0.0
        %494 = vmatprep.subr.mxu0 0.0
        %495 = vmatpush1.msra.mxu0 0.0
        %496 = vmatprep.mubr.f32.mxu0 0.0
        %497 = vmatmul.mubr.f32.gmra.mrb[0].mxu0 %v385
        %v498 = vpop.f32.mrb[0].mxu0
        %v499 = vadd.f32 0.0, %v498
        %v500 = vpop.f32.mrb[0].mxu0
        %501 = vmatprep.mubr.f32.mxu0 0.0
        %502 = vmatmul.mubr.f32.gmra.mrb[0].mxu0 %v388
        %v503 = vpop.f32.mrb[0].mxu0
        %v504 = vadd.f32 0.0, %v503
        %v505 = vpop.f32.mrb[0].mxu0
        %506 = vmatprep.mubr.f32.mxu0 0.0
        %507 = vmatmul.mubr.f32.gmra.mrb[0].mxu0 %v391
        %v508 = vpop.f32.mrb[0].mxu0
        %v509 = vadd.f32 0.0, %v508
        %v510 = vpop.f32.mrb[0].mxu0
        %511 = vmatprep.mubr.f32.mxu0 0.0
        %512 = vmatmul.mubr.f32.gmra.mrb[0].mxu0 %v394
        %v513 = vpop.f32.mrb[0].mxu0
        %v514 = vadd.f32 0.0, %v513
        %v515 = vpop.f32.mrb[0].mxu0
        %516 = vmatprep.mubr.f32.mxu0 0.0
        %517 = vmatmul.mubr.f32.gmra.mrb[0].mxu0 %v397
        %v518 = vpop.f32.mrb[0].mxu0
        %v519 = vadd.f32 0.0, %v518
        %v520 = vpop.f32.mrb[0].mxu0
        %521 = vmatprep.mubr.f32.mxu0 0.0
        %522 = vmatmul.mubr.f32.gmra.mrb[0].mxu0 %v400
        %v523 = vpop.f32.mrb[0].mxu0
        %v524 = vadd.f32 0.0, %v523
        %v525 = vpop.f32.mrb[0].mxu0
        %526 = vmatprep.mubr.f32.mxu0 0.0
        %527 = vmatmul.mubr.f32.gmra.mrb[0].mxu0 %v403
        %v528 = vpop.f32.mrb[0].mxu0
        %v529 = vadd.f32 0.0, %v528
        %v530 = vpop.f32.mrb[0].mxu0
        %531 = vmatprep.mubr.f32.mxu0 0.0
        %532 = vmatmul.mubr.f32.gmra.mrb[0].mxu0 %v406
        %v533 = vpop.f32.mrb[0].mxu0
        %v534 = vadd.f32 0.0, %v533
        %v535 = vpop.f32.mrb[0].mxu0
        %536 = vmatprep.mubr.f32.mxu0 0.0
        %537 = vmatmul.mubr.f32.gmra.mrb[0].mxu0 %v409
        %v538 = vpop.f32.mrb[0].mxu0
        %v539 = vadd.f32 0.0, %v538
        %v540 = vpop.f32.mrb[0].mxu0
        %541 = vmatprep.mubr.f32.mxu0 0.0
        %542 = vmatmul.mubr.f32.gmra.mrb[0].mxu0 %v412
        %v543 = vpop.f32.mrb[0].mxu0
        %v544 = vadd.f32 0.0, %v543
        %v545 = vpop.f32.mrb[0].mxu0
        %546 = vmatprep.mubr.f32.mxu0 0.0
        %547 = vmatmul.mubr.f32.gmra.mrb[0].mxu0 %v415
        %v548 = vpop.f32.mrb[0].mxu0
        %v549 = vadd.f32 0.0, %v548
        %v550 = vpop.f32.mrb[0].mxu0
        %551 = vmatprep.mubr.f32.mxu0 0.0
        %552 = vmatmul.mubr.f32.gmra.mrb[0].mxu0 %v418
        %v553 = vpop.f32.mrb[0].mxu0
        %v554 = vadd.f32 0.0, %v553
        %v555 = vpop.f32.mrb[0].mxu0
        %556 = vmatprep.mubr.f32.mxu0 0.0
        %557 = vmatmul.mubr.f32.gmra.mrb[0].mxu0 %v421
        %v558 = vpop.f32.mrb[0].mxu0
        %v559 = vadd.f32 0.0, %v558
        %v560 = vpop.f32.mrb[0].mxu0
        %561 = vmatprep.mubr.f32.mxu0 0.0
        %562 = vmatmul.mubr.f32.gmra.mrb[0].mxu0 %v424
        %v563 = vpop.f32.mrb[0].mxu0
        %v564 = vadd.f32 0.0, %v563
        %v565 = vpop.f32.mrb[0].mxu0
        %566 = vmatprep.mubr.f32.mxu0 0.0
        %567 = vmatmul.mubr.f32.gmra.mrb[0].mxu0 %v427
        %v568 = vpop.f32.mrb[0].mxu0
        %v569 = vadd.f32 0.0, %v568
        %v570 = vpop.f32.mrb[0].mxu0
        %571 = vmatprep.mubr.f32.mxu0 0.0
        %572 = vmatmul.mubr.f32.gmra.mrb[0].mxu0 %v430
        %v573 = vpop.f32.mrb[0].mxu0
        %v574 = vadd.f32 0.0, %v573
        %v575 = vpop.f32.mrb[0].mxu0
        %576 = vdwg.mxu0
        %v578 = vlaneseq
        %v579 = vshrl.u32 %v578, 7
        %v580 = vsub.s32 0, %v579
        %v581 = vrot.slane %v350, %v580
        %v583 = vadd.f32 %v581, %v499
        %v584 = vadd.f32 %v581, %v504
        %v585 = vadd.f32 %v581, %v509
        %v586 = vadd.f32 %v581, %v514
        %v587 = vadd.f32 %v581, %v519
        %v588 = vadd.f32 %v581, %v524
        %v589 = vadd.f32 %v581, %v529
        %v590 = vadd.f32 %v581, %v534
        %v591 = vadd.f32 %v581, %v539
        %v592 = vadd.f32 %v581, %v544
        %v593 = vadd.f32 %v581, %v549
        %v594 = vadd.f32 %v581, %v554
        %v595 = vadd.f32 %v581, %v559
        %v596 = vadd.f32 %v581, %v564
        %v597 = vadd.f32 %v581, %v569
        %v598 = vadd.f32 %v581, %v574
        %v599 = vlaneseq
        %v600 = vand.u32 %v599, 127
        %601 = vmin.xlane.f32.xlu0 %v583
        %v602 = vpop.xlane.xlu0 %601
        %603 = vmin.xlane.f32.xlu0 %v584
        %v604 = vpop.xlane.xlu0 %603
        %605 = vmin.xlane.f32.xlu0 %v585
        %v606 = vpop.xlane.xlu0 %605
        %607 = vmin.xlane.f32.xlu0 %v586
        %v608 = vpop.xlane.xlu0 %607
        %609 = vmin.xlane.f32.xlu0 %v587
        %v610 = vpop.xlane.xlu0 %609
        %611 = vmin.xlane.f32.xlu0 %v588
        %v612 = vpop.xlane.xlu0 %611
        %613 = vmin.xlane.f32.xlu0 %v589
        %v614 = vpop.xlane.xlu0 %613
        %615 = vmin.xlane.f32.xlu0 %v590
        %v616 = vpop.xlane.xlu0 %615
        %617 = vmin.xlane.f32.xlu0 %v591
        %v618 = vpop.xlane.xlu0 %617
        %619 = vmin.xlane.f32.xlu0 %v592
        %v620 = vpop.xlane.xlu0 %619
        %621 = vmin.xlane.f32.xlu0 %v593
        %v622 = vpop.xlane.xlu0 %621
        %623 = vmin.xlane.f32.xlu0 %v594
        %v624 = vpop.xlane.xlu0 %623
        %625 = vmin.xlane.f32.xlu0 %v595
        %v626 = vpop.xlane.xlu0 %625
        %627 = vmin.xlane.f32.xlu0 %v596
        %v628 = vpop.xlane.xlu0 %627
        %629 = vmin.xlane.f32.xlu0 %v597
        %v630 = vpop.xlane.xlu0 %629
        %631 = vmin.xlane.f32.xlu0 %v598
        %v632 = vpop.xlane.xlu0 %631
        %vm633 = vcmp.eq.f32.partialorder %v583, %v602
        %vm634 = vcmp.eq.f32.partialorder %v584, %v604
        %vm635 = vcmp.eq.f32.partialorder %v585, %v606
        %vm636 = vcmp.eq.f32.partialorder %v586, %v608
        %vm637 = vcmp.eq.f32.partialorder %v587, %v610
        %vm638 = vcmp.eq.f32.partialorder %v588, %v612
        %vm639 = vcmp.eq.f32.partialorder %v589, %v614
        %vm640 = vcmp.eq.f32.partialorder %v590, %v616
        %vm641 = vcmp.eq.f32.partialorder %v591, %v618
        %vm642 = vcmp.eq.f32.partialorder %v592, %v620
        %vm643 = vcmp.eq.f32.partialorder %v593, %v622
        %vm644 = vcmp.eq.f32.partialorder %v594, %v624
        %vm645 = vcmp.eq.f32.partialorder %v595, %v626
        %vm646 = vcmp.eq.f32.partialorder %v596, %v628
        %vm647 = vcmp.eq.f32.partialorder %v597, %v630
        %vm648 = vcmp.eq.f32.partialorder %v598, %v632
        %v649 = vsel %vm633, %v600, 128
        %v650 = vsel %vm634, %v600, 128
        %v651 = vsel %vm635, %v600, 128
        %v652 = vsel %vm636, %v600, 128
        %v653 = vsel %vm637, %v600, 128
        %v654 = vsel %vm638, %v600, 128
        %v655 = vsel %vm639, %v600, 128
        %v656 = vsel %vm640, %v600, 128
        %v657 = vsel %vm641, %v600, 128
        %v658 = vsel %vm642, %v600, 128
        %v659 = vsel %vm643, %v600, 128
        %v660 = vsel %vm644, %v600, 128
        %v661 = vsel %vm645, %v600, 128
        %v662 = vsel %vm646, %v600, 128
        %v663 = vsel %vm647, %v600, 128
        %v664 = vsel %vm648, %v600, 128
        %v665 = vand.u32 %v649, 65535
        %v666 = vshra.s32 %v649, 16
        %v667 = vcvt.s32.f32 %v665
        %v668 = vcvt.s32.f32 %v666
        %669 = vmin.xlane.f32.xlu0 %v668
        %v670 = vpop.xlane.xlu0 %669
        %vm671 = vcmp.eq.f32.partialorder %v668, %v670
        %v672 = vsel %vm671, %v667, inf
        %673 = vmin.xlane.f32.xlu0 %v672
        %v674 = vpop.xlane.xlu0 %673
        %v675 = vcvt.f32.s32 %v674
        %v676 = vcvt.f32.s32 %v670
        %v677 = vshll.u32 %v676, 16
        %v678 = vadd.s32 %v677, %v675
        %v679 = vand.u32 %v650, 65535
        %v680 = vshra.s32 %v650, 16
        %v681 = vcvt.s32.f32 %v679
        %v682 = vcvt.s32.f32 %v680
        %683 = vmin.xlane.f32.xlu0 %v682
        %v684 = vpop.xlane.xlu0 %683
        %vm685 = vcmp.eq.f32.partialorder %v682, %v684
        %v686 = vsel %vm685, %v681, inf
        %687 = vmin.xlane.f32.xlu0 %v686
        %v688 = vpop.xlane.xlu0 %687
        %v689 = vcvt.f32.s32 %v688
        %v690 = vcvt.f32.s32 %v684
        %v691 = vshll.u32 %v690, 16
        %v692 = vadd.s32 %v691, %v689
        %v693 = vand.u32 %v651, 65535
        %v694 = vshra.s32 %v651, 16
        %v695 = vcvt.s32.f32 %v693
        %v696 = vcvt.s32.f32 %v694
        %697 = vmin.xlane.f32.xlu0 %v696
        %v698 = vpop.xlane.xlu0 %697
        %vm699 = vcmp.eq.f32.partialorder %v696, %v698
        %v700 = vsel %vm699, %v695, inf
        %701 = vmin.xlane.f32.xlu0 %v700
        %v702 = vpop.xlane.xlu0 %701
        %v703 = vcvt.f32.s32 %v702
        %v704 = vcvt.f32.s32 %v698
        %v705 = vshll.u32 %v704, 16
        %v706 = vadd.s32 %v705, %v703
        %v707 = vand.u32 %v652, 65535
        %v708 = vshra.s32 %v652, 16
        %v709 = vcvt.s32.f32 %v707
        %v710 = vcvt.s32.f32 %v708
        %711 = vmin.xlane.f32.xlu0 %v710
        %v712 = vpop.xlane.xlu0 %711
        %vm713 = vcmp.eq.f32.partialorder %v710, %v712
        %v714 = vsel %vm713, %v709, inf
        %715 = vmin.xlane.f32.xlu0 %v714
        %v716 = vpop.xlane.xlu0 %715
        %v717 = vcvt.f32.s32 %v716
        %v718 = vcvt.f32.s32 %v712
        %v719 = vshll.u32 %v718, 16
        %v720 = vadd.s32 %v719, %v717
        %v721 = vand.u32 %v653, 65535
        %v722 = vshra.s32 %v653, 16
        %v723 = vcvt.s32.f32 %v721
        %v724 = vcvt.s32.f32 %v722
        %725 = vmin.xlane.f32.xlu0 %v724
        %v726 = vpop.xlane.xlu0 %725
        %vm727 = vcmp.eq.f32.partialorder %v724, %v726
        %v728 = vsel %vm727, %v723, inf
        %729 = vmin.xlane.f32.xlu0 %v728
        %v730 = vpop.xlane.xlu0 %729
        %v731 = vcvt.f32.s32 %v730
        %v732 = vcvt.f32.s32 %v726
        %v733 = vshll.u32 %v732, 16
        %v734 = vadd.s32 %v733, %v731
        %v735 = vand.u32 %v654, 65535
        %v736 = vshra.s32 %v654, 16
        %v737 = vcvt.s32.f32 %v735
        %v738 = vcvt.s32.f32 %v736
        %739 = vmin.xlane.f32.xlu0 %v738
        %v740 = vpop.xlane.xlu0 %739
        %vm741 = vcmp.eq.f32.partialorder %v738, %v740
        %v742 = vsel %vm741, %v737, inf
        %743 = vmin.xlane.f32.xlu0 %v742
        %v744 = vpop.xlane.xlu0 %743
        %v745 = vcvt.f32.s32 %v744
        %v746 = vcvt.f32.s32 %v740
        %v747 = vshll.u32 %v746, 16
        %v748 = vadd.s32 %v747, %v745
        %v749 = vand.u32 %v655, 65535
        %v750 = vshra.s32 %v655, 16
        %v751 = vcvt.s32.f32 %v749
        %v752 = vcvt.s32.f32 %v750
        %753 = vmin.xlane.f32.xlu0 %v752
        %v754 = vpop.xlane.xlu0 %753
        %vm755 = vcmp.eq.f32.partialorder %v752, %v754
        %v756 = vsel %vm755, %v751, inf
        %757 = vmin.xlane.f32.xlu0 %v756
        %v758 = vpop.xlane.xlu0 %757
        %v759 = vcvt.f32.s32 %v758
        %v760 = vcvt.f32.s32 %v754
        %v761 = vshll.u32 %v760, 16
        %v762 = vadd.s32 %v761, %v759
        %v763 = vand.u32 %v656, 65535
        %v764 = vshra.s32 %v656, 16
        %v765 = vcvt.s32.f32 %v763
        %v766 = vcvt.s32.f32 %v764
        %767 = vmin.xlane.f32.xlu0 %v766
        %v768 = vpop.xlane.xlu0 %767
        %vm769 = vcmp.eq.f32.partialorder %v766, %v768
        %v770 = vsel %vm769, %v765, inf
        %771 = vmin.xlane.f32.xlu0 %v770
        %v772 = vpop.xlane.xlu0 %771
        %v773 = vcvt.f32.s32 %v772
        %v774 = vcvt.f32.s32 %v768
        %v775 = vshll.u32 %v774, 16
        %v776 = vadd.s32 %v775, %v773
        %v777 = vand.u32 %v657, 65535
        %v778 = vshra.s32 %v657, 16
        %v779 = vcvt.s32.f32 %v777
        %v780 = vcvt.s32.f32 %v778
        %781 = vmin.xlane.f32.xlu0 %v780
        %v782 = vpop.xlane.xlu0 %781
        %vm783 = vcmp.eq.f32.partialorder %v780, %v782
        %v784 = vsel %vm783, %v779, inf
        %785 = vmin.xlane.f32.xlu0 %v784
        %v786 = vpop.xlane.xlu0 %785
        %v787 = vcvt.f32.s32 %v786
        %v788 = vcvt.f32.s32 %v782
        %v789 = vshll.u32 %v788, 16
        %v790 = vadd.s32 %v789, %v787
        %v791 = vand.u32 %v658, 65535
        %v792 = vshra.s32 %v658, 16
        %v793 = vcvt.s32.f32 %v791
        %v794 = vcvt.s32.f32 %v792
        %795 = vmin.xlane.f32.xlu0 %v794
        %v796 = vpop.xlane.xlu0 %795
        %vm797 = vcmp.eq.f32.partialorder %v794, %v796
        %v798 = vsel %vm797, %v793, inf
        %799 = vmin.xlane.f32.xlu0 %v798
        %v800 = vpop.xlane.xlu0 %799
        %v801 = vcvt.f32.s32 %v800
        %v802 = vcvt.f32.s32 %v796
        %v803 = vshll.u32 %v802, 16
        %v804 = vadd.s32 %v803, %v801
        %v805 = vand.u32 %v659, 65535
        %v806 = vshra.s32 %v659, 16
        %v807 = vcvt.s32.f32 %v805
        %v808 = vcvt.s32.f32 %v806
        %809 = vmin.xlane.f32.xlu0 %v808
        %v810 = vpop.xlane.xlu0 %809
        %vm811 = vcmp.eq.f32.partialorder %v808, %v810
        %v812 = vsel %vm811, %v807, inf
        %813 = vmin.xlane.f32.xlu0 %v812
        %v814 = vpop.xlane.xlu0 %813
        %v815 = vcvt.f32.s32 %v814
        %v816 = vcvt.f32.s32 %v810
        %v817 = vshll.u32 %v816, 16
        %v818 = vadd.s32 %v817, %v815
        %v819 = vand.u32 %v660, 65535
        %v820 = vshra.s32 %v660, 16
        %v821 = vcvt.s32.f32 %v819
        %v822 = vcvt.s32.f32 %v820
        %823 = vmin.xlane.f32.xlu0 %v822
        %v824 = vpop.xlane.xlu0 %823
        %vm825 = vcmp.eq.f32.partialorder %v822, %v824
        %v826 = vsel %vm825, %v821, inf
        %827 = vmin.xlane.f32.xlu0 %v826
        %v828 = vpop.xlane.xlu0 %827
        %v829 = vcvt.f32.s32 %v828
        %v830 = vcvt.f32.s32 %v824
        %v831 = vshll.u32 %v830, 16
        %v832 = vadd.s32 %v831, %v829
        %v833 = vand.u32 %v661, 65535
        %v834 = vshra.s32 %v661, 16
        %v835 = vcvt.s32.f32 %v833
        %v836 = vcvt.s32.f32 %v834
        %837 = vmin.xlane.f32.xlu0 %v836
        %v838 = vpop.xlane.xlu0 %837
        %vm839 = vcmp.eq.f32.partialorder %v836, %v838
        %v840 = vsel %vm839, %v835, inf
        %841 = vmin.xlane.f32.xlu0 %v840
        %v842 = vpop.xlane.xlu0 %841
        %v843 = vcvt.f32.s32 %v842
        %v844 = vcvt.f32.s32 %v838
        %v845 = vshll.u32 %v844, 16
        %v846 = vadd.s32 %v845, %v843
        %v847 = vand.u32 %v662, 65535
        %v848 = vshra.s32 %v662, 16
        %v849 = vcvt.s32.f32 %v847
        %v850 = vcvt.s32.f32 %v848
        %851 = vmin.xlane.f32.xlu0 %v850
        %v852 = vpop.xlane.xlu0 %851
        %vm853 = vcmp.eq.f32.partialorder %v850, %v852
        %v854 = vsel %vm853, %v849, inf
        %855 = vmin.xlane.f32.xlu0 %v854
        %v856 = vpop.xlane.xlu0 %855
        %v857 = vcvt.f32.s32 %v856
        %v858 = vcvt.f32.s32 %v852
        %v859 = vshll.u32 %v858, 16
        %v860 = vadd.s32 %v859, %v857
        %v861 = vand.u32 %v663, 65535
        %v862 = vshra.s32 %v663, 16
        %v863 = vcvt.s32.f32 %v861
        %v864 = vcvt.s32.f32 %v862
        %865 = vmin.xlane.f32.xlu0 %v864
        %v866 = vpop.xlane.xlu0 %865
        %vm867 = vcmp.eq.f32.partialorder %v864, %v866
        %v868 = vsel %vm867, %v863, inf
        %869 = vmin.xlane.f32.xlu0 %v868
        %v870 = vpop.xlane.xlu0 %869
        %v871 = vcvt.f32.s32 %v870
        %v872 = vcvt.f32.s32 %v866
        %v873 = vshll.u32 %v872, 16
        %v874 = vadd.s32 %v873, %v871
        %v875 = vand.u32 %v664, 65535
        %v876 = vshra.s32 %v664, 16
        %v877 = vcvt.s32.f32 %v875
        %v878 = vcvt.s32.f32 %v876
        %879 = vmin.xlane.f32.xlu0 %v878
        %v880 = vpop.xlane.xlu0 %879
        %vm881 = vcmp.eq.f32.partialorder %v878, %v880
        %v882 = vsel %vm881, %v877, inf
        %883 = vmin.xlane.f32.xlu0 %v882
        %v884 = vpop.xlane.xlu0 %883
        %v885 = vcvt.f32.s32 %v884
        %v886 = vcvt.f32.s32 %v880
        %v887 = vshll.u32 %v886, 16
        %v888 = vadd.s32 %v887, %v885
        %vm889 = vcmp.eq.s32.totalorder %v600, %v678
        %vm890 = vcmp.eq.s32.totalorder %v600, %v692
        %vm891 = vcmp.eq.s32.totalorder %v600, %v706
        %vm892 = vcmp.eq.s32.totalorder %v600, %v720
        %vm893 = vcmp.eq.s32.totalorder %v600, %v734
        %vm894 = vcmp.eq.s32.totalorder %v600, %v748
        %vm895 = vcmp.eq.s32.totalorder %v600, %v762
        %vm896 = vcmp.eq.s32.totalorder %v600, %v776
        %vm897 = vcmp.eq.s32.totalorder %v600, %v790
        %vm898 = vcmp.eq.s32.totalorder %v600, %v804
        %vm899 = vcmp.eq.s32.totalorder %v600, %v818
        %vm900 = vcmp.eq.s32.totalorder %v600, %v832
        %vm901 = vcmp.eq.s32.totalorder %v600, %v846
        %vm902 = vcmp.eq.s32.totalorder %v600, %v860
        %vm903 = vcmp.eq.s32.totalorder %v600, %v874
        %vm904 = vcmp.eq.s32.totalorder %v600, %v888
        %v905 = vsel %vm889, 1, 0
        %v906 = vsel %vm890, 1, 0
        %v907 = vsel %vm891, 1, 0
        %v908 = vsel %vm892, 1, 0
        %v909 = vsel %vm893, 1, 0
        %v910 = vsel %vm894, 1, 0
        %v911 = vsel %vm895, 1, 0
        %v912 = vsel %vm896, 1, 0
        %v913 = vsel %vm897, 1, 0
        %v914 = vsel %vm898, 1, 0
        %v915 = vsel %vm899, 1, 0
        %v916 = vsel %vm900, 1, 0
        %v917 = vsel %vm901, 1, 0
        %v918 = vsel %vm902, 1, 0
        %v919 = vsel %vm903, 1, 0
        %v920 = vsel %vm904, 1, 0
        %v921 = vcvt.s32.f32 %v905
        %v922 = vcvt.s32.f32 %v906
        %v923 = vcvt.s32.f32 %v907
        %v924 = vcvt.s32.f32 %v908
        %v925 = vcvt.s32.f32 %v909
        %v926 = vcvt.s32.f32 %v910
        %v927 = vcvt.s32.f32 %v911
        %v928 = vcvt.s32.f32 %v912
        %v929 = vcvt.s32.f32 %v913
        %v930 = vcvt.s32.f32 %v914
        %v931 = vcvt.s32.f32 %v915
        %v932 = vcvt.s32.f32 %v916
        %v933 = vcvt.s32.f32 %v917
        %v934 = vcvt.s32.f32 %v918
        %v935 = vcvt.s32.f32 %v919
        %v936 = vcvt.s32.f32 %v920
        %937 = vmatprep.subr.mxu0 0.0
        %938 = vmatpush1.xpose.msra.mxu0 %v921
        %939 = vmatprep.subr.mxu0 0.0
        %940 = vmatpush1.xpose.msra.mxu0 %v922
        %941 = vmatprep.subr.mxu0 0.0
        %942 = vmatpush1.xpose.msra.mxu0 %v923
        %943 = vmatprep.subr.mxu0 0.0
        %944 = vmatpush1.xpose.msra.mxu0 %v924
        %945 = vmatprep.subr.mxu0 0.0
        %946 = vmatpush1.xpose.msra.mxu0 %v925
        %947 = vmatprep.subr.mxu0 0.0
        %948 = vmatpush1.xpose.msra.mxu0 %v926
        %949 = vmatprep.subr.mxu0 0.0
        %950 = vmatpush1.xpose.msra.mxu0 %v927
        %951 = vmatprep.subr.mxu0 0.0
        %952 = vmatpush1.xpose.msra.mxu0 %v928
        %953 = vmatprep.subr.mxu0 0.0
        %954 = vmatpush1.xpose.msra.mxu0 %v929
        %955 = vmatprep.subr.mxu0 0.0
        %956 = vmatpush1.xpose.msra.mxu0 %v930
        %957 = vmatprep.subr.mxu0 0.0
        %958 = vmatpush1.xpose.msra.mxu0 %v931
        %959 = vmatprep.subr.mxu0 0.0
        %960 = vmatpush1.xpose.msra.mxu0 %v932
        %961 = vmatprep.subr.mxu0 0.0
        %962 = vmatpush1.xpose.msra.mxu0 %v933
        %963 = vmatprep.subr.mxu0 0.0
        %964 = vmatpush1.xpose.msra.mxu0 %v934
        %965 = vmatprep.subr.mxu0 0.0
        %966 = vmatpush1.xpose.msra.mxu0 %v935
        %967 = vmatprep.subr.mxu0 0.0
        %968 = vmatpush1.xpose.msra.mxu0 %v936
        %969 = vmatprep.subr.mxu0 0.0
        %970 = vmatpush1.xpose.msra.mxu0 0.0
        %971 = vmatprep.subr.mxu0 0.0
        %972 = vmatpush1.xpose.msra.mxu0 0.0
        %973 = vmatprep.subr.mxu0 0.0
        %974 = vmatpush1.xpose.msra.mxu0 0.0
        %975 = vmatprep.subr.mxu0 0.0
        %976 = vmatpush1.xpose.msra.mxu0 0.0
        %977 = vmatprep.subr.mxu0 0.0
        %978 = vmatpush1.xpose.msra.mxu0 0.0
        %979 = vmatprep.subr.mxu0 0.0
        %980 = vmatpush1.xpose.msra.mxu0 0.0
        %981 = vmatprep.subr.mxu0 0.0
        %982 = vmatpush1.xpose.msra.mxu0 0.0
        %983 = vmatprep.subr.mxu0 0.0
        %984 = vmatpush1.xpose.msra.mxu0 0.0
        %985 = vmatprep.subr.mxu0 0.0
        %986 = vmatpush1.xpose.msra.mxu0 0.0
        %987 = vmatprep.subr.mxu0 0.0
        %988 = vmatpush1.xpose.msra.mxu0 0.0
        %989 = vmatprep.subr.mxu0 0.0
        %990 = vmatpush1.xpose.msra.mxu0 0.0
        %991 = vmatprep.subr.mxu0 0.0
        %992 = vmatpush1.xpose.msra.mxu0 0.0
        %993 = vmatprep.subr.mxu0 0.0
        %994 = vmatpush1.xpose.msra.mxu0 0.0
        %995 = vmatprep.subr.mxu0 0.0
        %996 = vmatpush1.xpose.msra.mxu0 0.0
        %997 = vmatprep.subr.mxu0 0.0
        %998 = vmatpush1.xpose.msra.mxu0 0.0
        %999 = vmatprep.subr.mxu0 0.0
        %1000 = vmatpush1.xpose.msra.mxu0 0.0
        %1001 = vmatprep.mubr.f32.mxu0 0.0
        %1002 = vmatmul.mubr.f32.gmra.mrb[0].mxu0 %v346
        %v1003 = vpop.f32.mrb[0].mxu0
        %v1004 = vadd.f32 0.0, %v1003
        %v1005 = vpop.f32.mrb[0].mxu0
        %1006 = vmatprep.mubr.f32.mxu0 0.0
        %1007 = vmatmul.mubr.f32.gmra.mrb[0].mxu0 %v347
        %v1008 = vpop.f32.mrb[0].mxu0
        %v1009 = vadd.f32 0.0, %v1008
        %v1010 = vpop.f32.mrb[0].mxu0
        %1011 = vmatprep.mubr.f32.mxu0 0.0
        %1012 = vmatmul.mubr.f32.gmra.mrb[0].mxu0 %v348
        %v1013 = vpop.f32.mrb[0].mxu0
        %v1014 = vadd.f32 0.0, %v1013
        %v1015 = vpop.f32.mrb[0].mxu0
        %1016 = vmatprep.mubr.f32.mxu0 0.0
        %1017 = vmatmul.mubr.f32.gmra.mrb[0].mxu0 %v349
        %v1018 = vpop.f32.mrb[0].mxu0
        %v1019 = vadd.f32 0.0, %v1018
        %v1020 = vpop.f32.mrb[0].mxu0
        %1021 = vdwg.mxu0
        %v1022 = vmul.f32 %v1004, -0.5
        %v1023 = vmul.f32 %v1009, -0.5
        %v1024 = vmul.f32 %v1014, -0.5
        %v1025 = vmul.f32 %v1019, -0.5
        %1026 = vst [vmem:[%s311] sm:$0xff] %v1022
        %1027 = vst [vmem:[%s311 + $0x8] sm:$0xff] %v1023
        %1028 = vst [vmem:[%s311 + $0x10] sm:$0xff] %v1024
        %1029 = vst [vmem:[%s311 + $0x18] sm:$0xff] %v1025
        %1030 = vst [vmem:[%s318] sm:$0xff] %v921
        %1031 = vst [vmem:[%s318 + $0x8] sm:$0xff] %v922
        %1032 = vst [vmem:[%s318 + $0x10] sm:$0xff] %v923
        %1033 = vst [vmem:[%s318 + $0x18] sm:$0xff] %v924
        %1034 = vst [vmem:[%s318 + $0x20] sm:$0xff] %v925
        %1035 = vst [vmem:[%s318 + $0x28] sm:$0xff] %v926
        %1036 = vst [vmem:[%s318 + $0x30] sm:$0xff] %v927
        %1037 = vst [vmem:[%s318 + $0x38] sm:$0xff] %v928
        %1038 = vst [vmem:[%s318 + $0x40] sm:$0xff] %v929
        %1039 = vst [vmem:[%s318 + $0x48] sm:$0xff] %v930
        %1040 = vst [vmem:[%s318 + $0x50] sm:$0xff] %v931
        %1041 = vst [vmem:[%s318 + $0x58] sm:$0xff] %v932
        %1042 = vst [vmem:[%s318 + $0x60] sm:$0xff] %v933
        %1043 = vst [vmem:[%s318 + $0x68] sm:$0xff] %v934
        %1044 = vst [vmem:[%s318 + $0x70] sm:$0xff] %v935
        %1045 = vst [vmem:[%s318 + $0x78] sm:$0xff] %v936
        %v1046 = vsub.f32 %v1022, %v342
        %v1047 = vsub.f32 %v1023, %v343
        %v1048 = vsub.f32 %v1024, %v344
        %v1049 = vsub.f32 %v1025, %v345
        %v1050 = vmul.f32 %v1046, %v1046
        %v1051 = vmul.f32 %v1047, %v1047
        %v1052 = vmul.f32 %v1048, %v1048
        %v1053 = vmul.f32 %v1049, %v1049
        %v1054 = vadd.f32 %v1050, %v1051
        %v1055 = vadd.f32 %v1054, %v1052
        %v1056 = vadd.f32 %v1055, %v1053
        %1057 = vadd.xlane.f32.xlu0 %v1056
        %v1058 = vpop.xlane.xlu0 %1057
        %v1059 = vrot.slane %v1058, 4
        %v1060 = vadd.f32 %v1058, %v1059
        %v1061 = vrot.slane %v1060, 2
        %v1062 = vadd.f32 %v1060, %v1061
        %v1063 = vrot.slane %v1062, 1
        %v1064 = vadd.f32 %v1062, %v1063
        %s1065 = vtos %v1064
        %v1066 = vstv %s1065
        %vm1067 = vcmask 0
        %1068 = vst.msk [vmem:[%s341] sm:$0x1] %vm1067, %v1066
        %v1069 = vadd.f32 %v921, %v922
        %v1070 = vadd.f32 %v1069, %v923
        %v1071 = vadd.f32 %v1070, %v924
        %v1072 = vadd.f32 %v1071, %v925
        %v1073 = vadd.f32 %v1072, %v926
        %v1074 = vadd.f32 %v1073, %v927
        %v1075 = vadd.f32 %v1074, %v928
        %v1076 = vadd.f32 %v1075, %v929
        %v1077 = vadd.f32 %v1076, %v930
        %v1078 = vadd.f32 %v1077, %v931
        %v1079 = vadd.f32 %v1078, %v932
        %v1080 = vadd.f32 %v1079, %v933
        %v1081 = vadd.f32 %v1080, %v934
        %v1082 = vadd.f32 %v1081, %v935
        %v1083 = vadd.f32 %v1082, %v936
        %v1084 = vrot.slane %v1083, 4
        %v1085 = vadd.f32 %v1083, %v1084
        %v1086 = vrot.slane %v1085, 2
        %v1087 = vadd.f32 %v1085, %v1086
        %v1088 = vrot.slane %v1087, 1
        %v1089 = vadd.f32 %v1087, %v1088
        %1090 = vst [vmem:[%s333] sm:$0x1] %v1089
        %s1091 = sand.u32 %s120, 1
        %s1092 = scalar_lea.sflag [#allocation4], %s1091
        %s1093 = sand.u32 %s120, 1
        %s1094 = smul.addr %s1093, 32
        %s1095 = scalar_lea.vmem [#allocation7], %s1094
        %s1096 = sand.u32 %s28, 1
        %s1097 = scalar_lea.sflag [#allocation9], %s1096
        %s1098 = sand.u32 %s148, 1
        %s1099 = smul.addr %s1098, 128
        %s1100 = scalar_lea.vmem [#allocation8], %s1099
        %p1101 = scmp.lt.s32.totalorder %s32, 1
        %s1102 = scalar_select %p1101, %s32, 1
        %p1103 = scmp.lt.s32.totalorder %s33, 1
        %s1104 = scalar_select %p1103, %s33, 1
        %s1105 = smul.addr %s1102, 2
        %s1106 = sadd.s32 %s1104, %s1105
        %s1107 = scalar_lea.vmem %s5, %s1106
        %s1108 = sand.u32 %s28, 1
        %s1109 = scalar_lea.sflag [#allocation9], %s1108
        %s1110 = sand.u32 %s204, 1
        %s1111 = scalar_lea.vmem [#allocation10], %s1110
        // Predicated region
        $region41: #{tpu_custom_call.1} parent=31 // pred_check
          %p1112 = pneg %p130
        $region42: #{tpu_custom_call.1} parent=31 // pred_check_branch
          %1114 = sbr.rel (%p1112) target = $region44
        $region43: #{tpu_custom_call.1} parent=31 // pred_region
          %s1116 = ssub.s32 512, 512
          %1117 = vsyncadd %s1092, %s1116
          %s1118 = smul.addr %s32, 8
          %s1119 = sadd.s32 %s33, %s1118
          %s1120 = smul.addr %s1119, 128
          %s1121 = scalar_lea.hbm %s3, %s1120
          %s1122 = sshll.u32 %s1095, 4
          %s1123 = int_to_ptr.vmem [resolvable:$true] %s1122
          %1128 = dma.vmem_to_hbm [thread:$0]  %s1123, 512, %s1121, %s1092, 128, 256, 8
        $region44: #{tpu_custom_call.1} parent=31 // pred_fallthru
          _
        // Predicated region
        $region45: #{tpu_custom_call.1} parent=31 // pred_check
          %p1129 = pneg %p158
        $region46: #{tpu_custom_call.1} parent=31 // pred_check_branch
          %1131 = sbr.rel (%p1129) target = $region48
        $region47: #{tpu_custom_call.1} parent=31 // pred_region
          %s1132 = smul.u32 16, %s33
          %s1134 = ssub.s32 2048, 2048
          %1135 = vsyncadd %s1097, %s1134
          %s1136 = smul.addr %s32, 32
          %s1137 = sadd.s32 %s1132, %s1136
          %s1138 = smul.addr %s1137, 128
          %s1139 = scalar_lea.hbm %s4, %s1138
          %s1140 = sshll.u32 %s1100, 4
          %s1141 = int_to_ptr.vmem [resolvable:$true] %s1140
          %1146 = dma.vmem_to_hbm [thread:$0]  %s1141, 2048, %s1139, %s1097, 128, 128, 8
        $region48: #{tpu_custom_call.1} parent=31 // pred_fallthru
          _
        // Predicated region
        $region49: #{tpu_custom_call.1} parent=31 // pred_check
          %p1147 = pneg %p186
        $region50: #{tpu_custom_call.1} parent=31 // pred_check_branch
          %1149 = sbr.rel (%p1147) target = $region52
        $region51: #{tpu_custom_call.1} parent=31 // pred_region
          _
        $region52: #{tpu_custom_call.1} parent=31 // pred_fallthru
          _
        // Predicated region
        $region53: #{tpu_custom_call.1} parent=31 // pred_check
          %p1150 = pneg %p214
        $region54: #{tpu_custom_call.1} parent=31 // pred_check_branch
          %1152 = sbr.rel (%p1150) target = $region56
        $region55: #{tpu_custom_call.1} parent=31 // pred_region
          %s1154 = ssub.s32 16, 16
          %1155 = vsyncadd %s1109, %s1154
          %s1156 = smul.addr %s32, 2
          %s1157 = sadd.s32 %s33, %s1156
          %s1158 = smul.addr %s1157, 16
          %s1159 = scalar_lea.hbm %s6, %s1158
          %s1161 = sshll.u32 %s1111, 4
          %s1162 = int_to_ptr.vmem [resolvable:$true] %s1161
          %1164 = dma.vmem_to_hbm [thread:$0]  %s1162, 16, %s1159, %s1109
        $region56: #{tpu_custom_call.1} parent=31 // pred_fallthru
          _
      $region32: #{tpu_custom_call.1} parent=5 // pred_fallthru
        _
      %p1165 = scmp.le.s32.totalorder 2, %s23
      // Predicated region
      $region57: #{tpu_custom_call.1} parent=5 // pred_check
        %p1166 = pneg %p1165
      $region58: #{tpu_custom_call.1} parent=5 // pred_check_branch
        %1168 = sbr.rel (%p1166) target = $region60
      $region59: #{tpu_custom_call.1} parent=5 // pred_region
        %s1169 = ssub.s32 %s23, 2
        // Predicated region
        $region61: #{tpu_custom_call.1} parent=59 // pred_check
          %p1170 = pneg %p136
        $region62: #{tpu_custom_call.1} parent=59 // pred_check_branch
          %1172 = sbr.rel (%p1170) target = $region64
        $region63: #{tpu_custom_call.1} parent=59 // pred_region
          %s1173 = sand.u32 %s121, 1
          %s1174 = scalar_lea.sflag [#allocation4], %s1173
          %s1175 = sand.u32 %s121, 1
          %s1176 = smul.addr %s1175, 32
          %s1177 = scalar_lea.vmem [#allocation7], %s1176
          %1178 = dma.done %s1174, 512
        $region64: #{tpu_custom_call.1} parent=59 // pred_fallthru
          _
        // Predicated region
        $region65: #{tpu_custom_call.1} parent=59 // pred_check
          %p1179 = pneg %p164
        $region66: #{tpu_custom_call.1} parent=59 // pred_check_branch
          %1181 = sbr.rel (%p1179) target = $region68
        $region67: #{tpu_custom_call.1} parent=59 // pred_region
          %s1182 = sand.u32 %s29, 1
          %s1183 = scalar_lea.sflag [#allocation9], %s1182
          %s1184 = sand.u32 %s149, 1
          %s1185 = smul.addr %s1184, 128
          %s1186 = scalar_lea.vmem [#allocation8], %s1185
          %1187 = dma.done %s1183, 2048
        $region68: #{tpu_custom_call.1} parent=59 // pred_fallthru
          _
        // Predicated region
        $region69: #{tpu_custom_call.1} parent=59 // pred_check
          %p1188 = pneg %p192
        $region70: #{tpu_custom_call.1} parent=59 // pred_check_branch
          %1190 = sbr.rel (%p1188) target = $region72
        $region71: #{tpu_custom_call.1} parent=59 // pred_region
          %p1191 = scmp.lt.s32.totalorder %s34, 1
          %s1192 = scalar_select %p1191, %s34, 1
          %p1193 = scmp.lt.s32.totalorder %s35, 1
          %s1194 = scalar_select %p1193, %s35, 1
          %s1195 = smul.addr %s1192, 2
          %s1196 = sadd.s32 %s1194, %s1195
          %s1197 = scalar_lea.vmem %s5, %s1196
        $region72: #{tpu_custom_call.1} parent=59 // pred_fallthru
          _
        // Predicated region
        $region73: #{tpu_custom_call.1} parent=59 // pred_check
          %p1198 = pneg %p220
        $region74: #{tpu_custom_call.1} parent=59 // pred_check_branch
          %1200 = sbr.rel (%p1198) target = $region76
        $region75: #{tpu_custom_call.1} parent=59 // pred_region
          %s1201 = sand.u32 %s29, 1
          %s1202 = scalar_lea.sflag [#allocation9], %s1201
          %s1203 = sand.u32 %s205, 1
          %s1204 = scalar_lea.vmem [#allocation10], %s1203
          %1205 = dma.done %s1202, 16
        $region76: #{tpu_custom_call.1} parent=59 // pred_fallthru
          _
      $region60: #{tpu_custom_call.1} parent=5 // pred_fallthru
        _
    $region6: #{tpu_custom_call.1} parent=1 // loop_footer
      %s27 = sadd.s32 1, %s23
    $region7: #{tpu_custom_call.1} parent=1 // loop_footer_branch
      %22 = sbr.rel target = $region3
    $region8: #{tpu_custom_call.1} parent=1 // loop_exit
      _
    %1206 = vsyncpa [#allocation3], 1
    %s1207 = scalar_lea.sflag [#allocation3], 1
    %1208 = vsyncpa %s1207, 1
    %1209 = vsyncpa [#allocation6], 1
    %1210 = vsyncpa [#allocation4], 1
    %s1211 = scalar_lea.sflag [#allocation4], 1
    %1212 = vsyncpa %s1211, 1
    %1213 = vsyncpa [#allocation9], 1
    %s1214 = scalar_lea.sflag [#allocation9], 1
    %1215 = vsyncpa %s1214, 1

</llo_original>
